<compile_context>
chip_gen: v7x
topology: tpu7x:2x2x1
jax: 0.10.0
libtpu: 0.0.40
codegen_flags: <defaults>
</compile_context>

<pallas_src>
import jax
import jax.numpy as jnp
from jax.experimental import pallas as pl
from jax.experimental.pallas import tpu as pltpu

EPS = 1e-5          # torch.nn.InstanceNorm1d default eps
LAYER_1 = 16
LAYER_2 = 16


def _round_up(a, m):
    return (a + m - 1) // m * m


def lang2020_kernel(x_ref, w1_ref, b1_ref, w2_ref, b2_ref, w3_ref, b3_ref, o_ref):
    # x tile in natural (TB, D) layout; upcast in-kernel so bf16 streaming is allowed.
    x = x_ref[...].astype(jnp.float32)                          # (TB, D)
    inv_d = jnp.float32(1.0 / x_ref.shape[1])

    # ---- InstanceNorm1d (C=1): one-pass moments, lane-axis (XLU) reductions ----
    s1 = jnp.sum(x, axis=1, keepdims=True)                      # (TB, 1)
    s2 = jnp.sum(x * x, axis=1, keepdims=True)                  # (TB, 1)
    mean = s1 * inv_d
    var = jnp.maximum(s2 * inv_d - mean * mean, 0.0)            # biased variance
    xn = (x - mean) * jax.lax.rsqrt(var + EPS)                  # (TB, D)

    # ---- fc1 + ReLU :  (16, D) @ (D, TB).  The .T flips batch into lanes so the
    #      remaining layers and the output store stay lane-dense.
    h1 = jnp.dot(w1_ref[...], xn.T, preferred_element_type=jnp.float32) + b1_ref[...]
    h1 = jnp.maximum(h1, 0.0)

    # ---- fc2 + ReLU :  (16, 16) @ (16, TB) ----
    h2 = jnp.dot(w2_ref[...], h1, preferred_element_type=jnp.float32) + b2_ref[...]
    h2 = jnp.maximum(h2, 0.0)

    # ---- fc3 (no activation) :  (O, 16) @ (16, TB) -> lane-dense (O, TB) store ----
    o_ref[...] = jnp.dot(w3_ref[...], h2, preferred_element_type=jnp.float32) + b3_ref[...]


def _pick_batch_tile(batch, input_size, output_size, batch_tile):
    """Largest lane-aligned batch tile fitting a VMEM budget valid on v5e/v6e/v7x."""
    lanes_d = _round_up(input_size, 128)   # x tile lanes are padded to 128 in VMEM
    sub_d = _round_up(input_size, 8)       # transposed xn scratch (D sublanes, TB lanes)
    sub_o = _round_up(output_size, 8)
    # f32 bytes held live per batch row: 2 double-buffered input tiles + xn + xn^T
    # scratch + hidden activations / matmul slack + 2 double-buffered output tiles.
    per_row = 4 * (3 * lanes_d + sub_d + 4 * LAYER_1 + 2 * sub_o)
    budget = 18 * 1024 * 1024              # leaves headroom even on v7x (64 MiB / TC)
    tb_cap = max(128, (budget // per_row) // 128 * 128)

    tb = _round_up(max(min(int(batch_tile), tb_cap), 128), 128)   # defensive 128 align
    tb = min(tb, _round_up(batch, 128))
    # Ensure >= 2 grid steps whenever batch allows it -> v7x megacore uses both TCs.
    if batch >= 256:
        tb = min(tb, _round_up(pl.cdiv(batch, 2), 128))
    tb = max(tb, 128)

    vmem_bytes = per_row * tb + (1 << 20)  # + weights/biases/compiler scratch slack
    vmem_limit = int(min(max(int(vmem_bytes * 1.25), 16 * 1024 * 1024),
                         40 * 1024 * 1024))
    return tb, vmem_limit


def lang2020_forward(x, params, *, batch_tile=32768, feature_major_out=False):
    """x: (batch, 1, input_size) -> (batch, output_size) float32.

    If feature_major_out=True, returns the kernel-native (output_size, batch) layout
    and skips the final (tiny) transpose.
    """
    w1, b1, w2, b2, w3, b3 = params
    batch = x.shape[0]
    input_size = w1.shape[1]
    output_size = w3.shape[0]

    # Flatten (C=1).  reshape is metadata-only: no wrapper-side HBM round trip.
    # The input dtype is streamed as-is (bf16 allowed) and upcast inside the kernel.
    x2d = x.reshape(batch, input_size)

    tb, vmem_limit = _pick_batch_tile(batch, input_size, output_size, batch_tile)
    grid = (pl.cdiv(batch, tb),)

    w1f = w1.astype(jnp.float32)                   # (16, D)  -- already (out, in)
    w2f = w2.astype(jnp.float32)                   # (16, 16)
    w3f = w3.astype(jnp.float32)                   # (O, 16)
    b1c = b1.reshape(-1, 1).astype(jnp.float32)    # (16, 1) column bias
    b2c = b2.reshape(-1, 1).astype(jnp.float32)
    b3c = b3.reshape(-1, 1).astype(jnp.float32)

    x_spec = pl.BlockSpec((tb, input_size), lambda i: (i, 0))
    out_spec = pl.BlockSpec((output_size, tb), lambda i: (0, i))

    def resident(shape):
        # Full-array block, same index every grid step -> stays resident in VMEM.
        return pl.BlockSpec(shape, lambda i: (0, 0))

    flops = 2 * batch * (input_size * LAYER_1 + LAYER_1 * LAYER_2 + LAYER_2 * output_size)
    bytes_accessed = (batch * input_size * x2d.dtype.itemsize
                      + batch * output_size * 4
                      + 4 * (w1.size + b1.size + w2.size + b2.size + w3.size + b3.size))
    cost = pl.CostEstimate(flops=flops, transcendentals=0, bytes_accessed=bytes_accessed)

    out_t = pl.pallas_call(
        lang2020_kernel,
        out_shape=jax.ShapeDtypeStruct((output_size, batch), jnp.float32),
        grid=grid,
        in_specs=[
            x_spec,
            resident(w1f.shape), resident(b1c.shape),
            resident(w2f.shape), resident(b2c.shape),
            resident(w3f.shape), resident(b3c.shape),
        ],
        out_specs=out_spec,
        compiler_params=pltpu.CompilerParams(
            dimension_semantics=("parallel",),      # megacore sharding on v7x
            vmem_limit_bytes=vmem_limit,            # sized from the actual buffers
        ),
        cost_estimate=cost,
    )(x2d, w1f, b1c, w2f, b2c, w3f, b3c)

    if feature_major_out:
        return out_t                                # (O, batch)
    return out_t.T                                  # (batch, O), matches the PyTorch module


def init_params(key, input_size, output_size):
    """Deterministic init matching the nn.Linear shapes in __init__."""
    keys = jax.random.split(key, 6)

    def linear(kw, kb, fan_in, fan_out):
        bound = 1.0 / jnp.sqrt(fan_in)
        w = jax.random.uniform(kw, (fan_out, fan_in), jnp.float32, -bound, bound)
        b = jax.random.uniform(kb, (fan_out,), jnp.float32, -bound, bound)
        return w, b

    w1, b1 = linear(keys[0], keys[1], input_size, LAYER_1)
    w2, b2 = linear(keys[2], keys[3], LAYER_1, LAYER_2)
    w3, b3 = linear(keys[4], keys[5], LAYER_2, output_size)
    return (w1, b1, w2, b2, w3, b3)


def reference_forward(x, params):
    """Pure-JAX reference mirroring the PyTorch forward."""
    w1, b1, w2, b2, w3, b3 = params
    batch = x.shape[0]
    mean = jnp.mean(x, axis=-1, keepdims=True)
    var = jnp.mean((x - mean) ** 2, axis=-1, keepdims=True)
    xn = (x - mean) / jnp.sqrt(var + EPS)
    xf = xn.reshape(batch, -1)
    h1 = jnp.maximum(xf @ w1.T + b1, 0.0)
    h2 = jnp.maximum(h1 @ w2.T + b2, 0.0)
    return h2 @ w3.T + b3


if __name__ == "__main__":
    key = jax.random.PRNGKey(0)
    k_x1, k_x2, k_p = jax.random.split(key, 3)

    input_size, output_size = 24, 4
    params = init_params(k_p, input_size, output_size)

    # Small canonical test: (batch, 1, input_size).
    batch = 8
    x = jax.random.normal(k_x1, (batch, 1, input_size), jnp.float32)
    out = jax.block_until_ready(lang2020_forward(x, params))
    ref = reference_forward(x, params)
    assert out.shape == (batch, output_size), out.shape
    assert jnp.allclose(out, ref, atol=1e-4, rtol=1e-4), float(jnp.max(jnp.abs(out - ref)))

    # Exercises the ragged cdiv tail AND the >=2-step megacore split (tb=256, grid=2).
    batch2 = 300
    x2 = jax.random.normal(k_x2, (batch2, 1, input_size), jnp.float32)
    out2 = jax.block_until_ready(lang2020_forward(x2, params))
    ref2 = reference_forward(x2, params)
    assert out2.shape == (batch2, output_size), out2.shape
    assert jnp.allclose(out2, ref2, atol=1e-4, rtol=1e-4), float(jnp.max(jnp.abs(out2 - ref2)))

    print("KERNEL_OK")
</pallas_src>

<mosaic_0001>
module attributes {stable_mosaic.version = 11 : i64} {
  func.func @lang2020_kernel(%arg0: i32, %arg1: memref<128x24xf32, #tpu.memory_space<vmem>>, %arg2: memref<16x24xf32, #tpu.memory_space<vmem>>, %arg3: memref<16x1xf32, #tpu.memory_space<vmem>>, %arg4: memref<16x16xf32, #tpu.memory_space<vmem>>, %arg5: memref<16x1xf32, #tpu.memory_space<vmem>>, %arg6: memref<4x16xf32, #tpu.memory_space<vmem>>, %arg7: memref<4x1xf32, #tpu.memory_space<vmem>>, %arg8: memref<4x128xf32, #tpu.memory_space<vmem>>) attributes {dimension_semantics = [#tpu.dimension_semantics<parallel>], iteration_bounds = array<i64: 1>, scalar_prefetch = 0 : i64, scratch_operands = 0 : i64, tpu.core_type = #tpu.core_type<tc>, window_params = [{transform_indices = @transform_0, window_bounds = array<i64: 128, 24>}, {pipeline_mode = #tpu.pipeline_mode<synchronous>, transform_indices = @transform_1, window_bounds = array<i64: 16, 24>}, {pipeline_mode = #tpu.pipeline_mode<synchronous>, transform_indices = @transform_2, window_bounds = array<i64: 16, 1>}, {pipeline_mode = #tpu.pipeline_mode<synchronous>, transform_indices = @transform_3, window_bounds = array<i64: 16, 16>}, {pipeline_mode = #tpu.pipeline_mode<synchronous>, transform_indices = @transform_4, window_bounds = array<i64: 16, 1>}, {pipeline_mode = #tpu.pipeline_mode<synchronous>, transform_indices = @transform_5, window_bounds = array<i64: 4, 16>}, {pipeline_mode = #tpu.pipeline_mode<synchronous>, transform_indices = @transform_6, window_bounds = array<i64: 4, 1>}, {transform_indices = @transform_7, window_bounds = array<i64: 4, 128>}]} {
    %c0 = arith.constant 0 : index
    %c0_0 = arith.constant 0 : index
    %0 = vector.load %arg1[%c0, %c0_0] : memref<128x24xf32, #tpu.memory_space<vmem>>, vector<128x24xf32>
    %cst = arith.constant dense<0.000000e+00> : vector<128xf32>
    %1 = vector.multi_reduction <add>, %0, %cst [1] : vector<128x24xf32> to vector<128xf32>
    %2 = vector.shape_cast %1 : vector<128xf32> to vector<128x1xf32>
    %3 = arith.mulf %0, %0 : vector<128x24xf32>
    %cst_1 = arith.constant dense<0.000000e+00> : vector<128xf32>
    %4 = vector.multi_reduction <add>, %3, %cst_1 [1] : vector<128x24xf32> to vector<128xf32>
    %5 = vector.shape_cast %4 : vector<128xf32> to vector<128x1xf32>
    %cst_2 = arith.constant 0.0416666679 : f32
    %6 = vector.broadcast %cst_2 : f32 to vector<128x1xf32>
    %7 = arith.mulf %2, %6 : vector<128x1xf32>
    %cst_3 = arith.constant 0.0416666679 : f32
    %8 = vector.broadcast %cst_3 : f32 to vector<128x1xf32>
    %9 = arith.mulf %5, %8 : vector<128x1xf32>
    %10 = arith.mulf %7, %7 : vector<128x1xf32>
    %11 = arith.subf %9, %10 : vector<128x1xf32>
    %cst_4 = arith.constant 0.000000e+00 : f32
    %12 = vector.broadcast %cst_4 : f32 to vector<128x1xf32>
    %13 = arith.maximumf %11, %12 : vector<128x1xf32>
    %14 = vector.broadcast %7 : vector<128x1xf32> to vector<128x24xf32>
    %15 = arith.subf %0, %14 : vector<128x24xf32>
    %cst_5 = arith.constant 9.99999974E-6 : f32
    %16 = vector.broadcast %cst_5 : f32 to vector<128x1xf32>
    %17 = arith.addf %13, %16 : vector<128x1xf32>
    %18 = math.rsqrt %17 : vector<128x1xf32>
    %19 = vector.broadcast %18 : vector<128x1xf32> to vector<128x24xf32>
    %20 = arith.mulf %15, %19 : vector<128x24xf32>
    %c0_6 = arith.constant 0 : index
    %c0_7 = arith.constant 0 : index
    %21 = vector.load %arg2[%c0_6, %c0_7] : memref<16x24xf32, #tpu.memory_space<vmem>>, vector<16x24xf32>
    %22 = tpu.transpose %20, [1, 0] : vector<128x24xf32> -> vector<24x128xf32>
    %cst_8 = arith.constant dense<0.000000e+00> : vector<16x128xf32>
    %23 = tpu.matmul %21, %22, %cst_8 {dimension_numbers = #tpu.dot_dimension_numbers<[1], [0], [0], [1], [0, 0, 1, 1], [], []>} : vector<16x24xf32>, vector<24x128xf32>, vector<16x128xf32> -> vector<16x128xf32>
    %c0_9 = arith.constant 0 : index
    %c0_10 = arith.constant 0 : index
    %24 = vector.load %arg3[%c0_9, %c0_10] : memref<16x1xf32, #tpu.memory_space<vmem>>, vector<16x1xf32>
    %25 = vector.broadcast %24 : vector<16x1xf32> to vector<16x128xf32>
    %26 = arith.addf %23, %25 : vector<16x128xf32>
    %cst_11 = arith.constant 0.000000e+00 : f32
    %27 = vector.broadcast %cst_11 : f32 to vector<16x128xf32>
    %28 = arith.maximumf %26, %27 : vector<16x128xf32>
    %c0_12 = arith.constant 0 : index
    %c0_13 = arith.constant 0 : index
    %29 = vector.load %arg4[%c0_12, %c0_13] : memref<16x16xf32, #tpu.memory_space<vmem>>, vector<16x16xf32>
    %cst_14 = arith.constant dense<0.000000e+00> : vector<16x128xf32>
    %30 = tpu.matmul %29, %28, %cst_14 {dimension_numbers = #tpu.dot_dimension_numbers<[1], [0], [0], [1], [0, 0, 1, 1], [], []>} : vector<16x16xf32>, vector<16x128xf32>, vector<16x128xf32> -> vector<16x128xf32>
    %c0_15 = arith.constant 0 : index
    %c0_16 = arith.constant 0 : index
    %31 = vector.load %arg5[%c0_15, %c0_16] : memref<16x1xf32, #tpu.memory_space<vmem>>, vector<16x1xf32>
    %32 = vector.broadcast %31 : vector<16x1xf32> to vector<16x128xf32>
    %33 = arith.addf %30, %32 : vector<16x128xf32>
    %cst_17 = arith.constant 0.000000e+00 : f32
    %34 = vector.broadcast %cst_17 : f32 to vector<16x128xf32>
    %35 = arith.maximumf %33, %34 : vector<16x128xf32>
    %c0_18 = arith.constant 0 : index
    %c0_19 = arith.constant 0 : index
    %36 = vector.load %arg6[%c0_18, %c0_19] : memref<4x16xf32, #tpu.memory_space<vmem>>, vector<4x16xf32>
    %cst_20 = arith.constant dense<0.000000e+00> : vector<4x128xf32>
    %37 = tpu.matmul %36, %35, %cst_20 {dimension_numbers = #tpu.dot_dimension_numbers<[1], [0], [0], [1], [0, 0, 1, 1], [], []>} : vector<4x16xf32>, vector<16x128xf32>, vector<4x128xf32> -> vector<4x128xf32>
    %c0_21 = arith.constant 0 : index
    %c0_22 = arith.constant 0 : index
    %38 = vector.load %arg7[%c0_21, %c0_22] : memref<4x1xf32, #tpu.memory_space<vmem>>, vector<4x1xf32>
    %39 = vector.broadcast %38 : vector<4x1xf32> to vector<4x128xf32>
    %40 = arith.addf %37, %39 : vector<4x128xf32>
    %c0_23 = arith.constant 0 : index
    %c0_24 = arith.constant 0 : index
    %41 = vector.load %arg8[%c0_23, %c0_24] : memref<4x128xf32, #tpu.memory_space<vmem>>, vector<4x128xf32>
    tpu.vector_store %arg8[%c0_23, %c0_24], %40 {strides = array<i32>} : memref<4x128xf32, #tpu.memory_space<vmem>>, vector<4x128xf32>,
    return
  }
  func.func @transform_0(%arg0: i32) -> (i32, i32) {
    %c0_i32 = arith.constant 0 : i32
    %c0_i32_0 = arith.constant 0 : i32
    return %arg0, %c0_i32 : i32, i32
  }
  func.func @transform_1(%arg0: i32) -> (i32, i32) {
    %c0_i32 = arith.constant 0 : i32
    %c0_i32_0 = arith.constant 0 : i32
    %c0_i32_1 = arith.constant 0 : i32
    return %c0_i32, %c0_i32_0 : i32, i32
  }
  func.func @transform_2(%arg0: i32) -> (i32, i32) {
    %c0_i32 = arith.constant 0 : i32
    %c0_i32_0 = arith.constant 0 : i32
    %c0_i32_1 = arith.constant 0 : i32
    return %c0_i32, %c0_i32_0 : i32, i32
  }
  func.func @transform_3(%arg0: i32) -> (i32, i32) {
    %c0_i32 = arith.constant 0 : i32
    %c0_i32_0 = arith.constant 0 : i32
    %c0_i32_1 = arith.constant 0 : i32
    return %c0_i32, %c0_i32_0 : i32, i32
  }
  func.func @transform_4(%arg0: i32) -> (i32, i32) {
    %c0_i32 = arith.constant 0 : i32
    %c0_i32_0 = arith.constant 0 : i32
    %c0_i32_1 = arith.constant 0 : i32
    return %c0_i32, %c0_i32_0 : i32, i32
  }
  func.func @transform_5(%arg0: i32) -> (i32, i32) {
    %c0_i32 = arith.constant 0 : i32
    %c0_i32_0 = arith.constant 0 : i32
    %c0_i32_1 = arith.constant 0 : i32
    return %c0_i32, %c0_i32_0 : i32, i32
  }
  func.func @transform_6(%arg0: i32) -> (i32, i32) {
    %c0_i32 = arith.constant 0 : i32
    %c0_i32_0 = arith.constant 0 : i32
    %c0_i32_1 = arith.constant 0 : i32
    return %c0_i32, %c0_i32_0 : i32, i32
  }
  func.func @transform_7(%arg0: i32) -> (i32, i32) {
    %c0_i32 = arith.constant 0 : i32
    %c0_i32_0 = arith.constant 0 : i32
    return %c0_i32, %arg0 : i32, i32
  }
}

</mosaic_0001>

<llo_original>
// kernel: tpu_custom_call.1
$region0: #{tpu_custom_call.1}
  #allocation0 [shape = 'u32[]', space=smem, size = 0x4, offset = 0x4, fixed_abs, tag = 'smem constant byte address 0x4 - core index']
  #allocation1 [shape = 'u32[144,128]{1,0:T(1,128)}', space=vmem, size = 0x12000, scoped, tag = 'internal scratch']
  %s0 = inlined_call_operand.hbm [shape: f32[8,24], index: 0, kind: input, shape index: {}]
  %s1 = inlined_call_operand.vmem [shape: f32[16,24], index: 1, kind: input, shape index: {}]
  %s2 = inlined_call_operand.vmem [shape: f32[16,1], index: 2, kind: input, shape index: {}]
  %s3 = inlined_call_operand.vmem [shape: f32[16,16], index: 3, kind: input, shape index: {}]
  %s4 = inlined_call_operand.vmem [shape: f32[16,1], index: 4, kind: input, shape index: {}]
  %s5 = inlined_call_operand.vmem [shape: f32[4,16], index: 5, kind: input, shape index: {}]
  %s6 = inlined_call_operand.vmem [shape: f32[4,1], index: 6, kind: input, shape index: {}]
  %s7 = inlined_call_operand.hbm [shape: f32[4,8], index: 7, kind: output, shape index: {}]
  %s8 = sld [smem:[#allocation0]]
  $region42: #{tpu_custom_call.1} parent=0
    _
  %s10 = ssub.s32 1, %s8
  %s11 = scalar_select 0, %s10, %s8
  $region1: #{tpu_custom_call.1} parent=0
    #allocation2 [shape = 'u8[65536]{0}', space=vmem, size = 0x10000, scoped, tag = 'input window, operand 0, single buffered']
    #allocation3 [shape = 's32[1]{0}', space=sflag, size = 0x4, scoped, tag = 'scoped memory for tpu_custom_call.1']
    #allocation4 [shape = 's32[1]{0}', space=sflag, size = 0x4, scoped, tag = 'scoped memory for tpu_custom_call.1']
    #allocation5 [shape = 'u8[2048]{0}', space=vmem, size = 0x800, scoped, tag = 'output window, operand 0, single buffered']
    %12 = vsyncpa [#allocation3], 0
    %13 = vsyncpa [#allocation4], 0
    // Predicated region
    $region2: #{tpu_custom_call.1} parent=1 // pred_check
      _
    $region3: #{tpu_custom_call.1} parent=1 // pred_check_branch
      %15 = sbr.rel (0) target = $region5
    $region4: #{tpu_custom_call.1} parent=1 // pred_region
      %s17 = ssub.s32 2048, 128
      %18 = vsyncadd [#allocation3], %s17
      %s19 = sshll.u32 [#allocation2], 4
      %s20 = int_to_ptr.vmem [resolvable:$true] %s19
      %25 = dma.hbm_to_vmem [thread:$0]  %s0, 128, %s20, [#allocation3], 128, 128, 8
    $region5: #{tpu_custom_call.1} parent=1 // pred_fallthru
      _
    // Predicated region
    $region6: #{tpu_custom_call.1} parent=1 // pred_check
      _
    $region7: #{tpu_custom_call.1} parent=1 // pred_check_branch
      %27 = sbr.rel (0) target = $region9
    $region8: #{tpu_custom_call.1} parent=1 // pred_region
      _
    $region9: #{tpu_custom_call.1} parent=1 // pred_fallthru
      _
    // Predicated region
    $region10: #{tpu_custom_call.1} parent=1 // pred_check
      _
    $region11: #{tpu_custom_call.1} parent=1 // pred_check_branch
      %29 = sbr.rel (0) target = $region13
    $region12: #{tpu_custom_call.1} parent=1 // pred_region
      _
    $region13: #{tpu_custom_call.1} parent=1 // pred_fallthru
      _
    // Predicated region
    $region14: #{tpu_custom_call.1} parent=1 // pred_check
      _
    $region15: #{tpu_custom_call.1} parent=1 // pred_check_branch
      %31 = sbr.rel (0) target = $region17
    $region16: #{tpu_custom_call.1} parent=1 // pred_region
      _
    $region17: #{tpu_custom_call.1} parent=1 // pred_fallthru
      _
    // Predicated region
    $region18: #{tpu_custom_call.1} parent=1 // pred_check
      _
    $region19: #{tpu_custom_call.1} parent=1 // pred_check_branch
      %33 = sbr.rel (0) target = $region21
    $region20: #{tpu_custom_call.1} parent=1 // pred_region
      _
    $region21: #{tpu_custom_call.1} parent=1 // pred_fallthru
      _
    // Predicated region
    $region22: #{tpu_custom_call.1} parent=1 // pred_check
      _
    $region23: #{tpu_custom_call.1} parent=1 // pred_check_branch
      %35 = sbr.rel (0) target = $region25
    $region24: #{tpu_custom_call.1} parent=1 // pred_region
      _
    $region25: #{tpu_custom_call.1} parent=1 // pred_fallthru
      _
    // Predicated region
    $region26: #{tpu_custom_call.1} parent=1 // pred_check
      _
    $region27: #{tpu_custom_call.1} parent=1 // pred_check_branch
      %37 = sbr.rel (0) target = $region29
    $region28: #{tpu_custom_call.1} parent=1 // pred_region
      _
    $region29: #{tpu_custom_call.1} parent=1 // pred_fallthru
      _
    // Predicated region
    $region30: #{tpu_custom_call.1} parent=1 // pred_check
      _
    $region31: #{tpu_custom_call.1} parent=1 // pred_check_branch
      %39 = sbr.rel (0) target = $region33
    $region32: #{tpu_custom_call.1} parent=1 // pred_region
      %40 = dma.done [#allocation3], 2048
    $region33: #{tpu_custom_call.1} parent=1 // pred_fallthru
      _
    %v41 = vld [vmem:[#allocation2] sm:$0xff]
    %v42 = vld [vmem:[#allocation2 + $0x8] sm:$0xff]
    %v43 = vld [vmem:[#allocation2 + $0x10] sm:$0xff]
    %v44 = vld [vmem:[#allocation2 + $0x18] sm:$0xff]
    %v45 = vld [vmem:[#allocation2 + $0x20] sm:$0xff]
    %v46 = vld [vmem:[#allocation2 + $0x28] sm:$0xff]
    %v47 = vld [vmem:[#allocation2 + $0x30] sm:$0xff]
    %v48 = vld [vmem:[#allocation2 + $0x38] sm:$0xff]
    %v49 = vld [vmem:[#allocation2 + $0x40] sm:$0xff]
    %v50 = vld [vmem:[#allocation2 + $0x48] sm:$0xff]
    %v51 = vld [vmem:[#allocation2 + $0x50] sm:$0xff]
    %v52 = vld [vmem:[#allocation2 + $0x58] sm:$0xff]
    %v53 = vld [vmem:[#allocation2 + $0x60] sm:$0xff]
    %v54 = vld [vmem:[#allocation2 + $0x68] sm:$0xff]
    %v55 = vld [vmem:[#allocation2 + $0x70] sm:$0xff]
    %v56 = vld [vmem:[#allocation2 + $0x78] sm:$0xff]
    %vm57 = vcmask 195584
    %v58 = vsel %vm57, %v41, 0.0
    %59 = vadd.xlane.f32.xlu0 %v58
    %v60 = vpop.xlane.xlu0 %59
    %v61 = vsel %vm57, %v42, 0.0
    %62 = vadd.xlane.f32.xlu0 %v61
    %v63 = vpop.xlane.xlu0 %62
    %v64 = vsel %vm57, %v43, 0.0
    %65 = vadd.xlane.f32.xlu0 %v64
    %v66 = vpop.xlane.xlu0 %65
    %v67 = vsel %vm57, %v44, 0.0
    %68 = vadd.xlane.f32.xlu0 %v67
    %v69 = vpop.xlane.xlu0 %68
    %v70 = vsel %vm57, %v45, 0.0
    %71 = vadd.xlane.f32.xlu0 %v70
    %v72 = vpop.xlane.xlu0 %71
    %v73 = vsel %vm57, %v46, 0.0
    %74 = vadd.xlane.f32.xlu0 %v73
    %v75 = vpop.xlane.xlu0 %74
    %v76 = vsel %vm57, %v47, 0.0
    %77 = vadd.xlane.f32.xlu0 %v76
    %v78 = vpop.xlane.xlu0 %77
    %v79 = vsel %vm57, %v48, 0.0
    %80 = vadd.xlane.f32.xlu0 %v79
    %v81 = vpop.xlane.xlu0 %80
    %v82 = vsel %vm57, %v49, 0.0
    %83 = vadd.xlane.f32.xlu0 %v82
    %v84 = vpop.xlane.xlu0 %83
    %v85 = vsel %vm57, %v50, 0.0
    %86 = vadd.xlane.f32.xlu0 %v85
    %v87 = vpop.xlane.xlu0 %86
    %v88 = vsel %vm57, %v51, 0.0
    %89 = vadd.xlane.f32.xlu0 %v88
    %v90 = vpop.xlane.xlu0 %89
    %v91 = vsel %vm57, %v52, 0.0
    %92 = vadd.xlane.f32.xlu0 %v91
    %v93 = vpop.xlane.xlu0 %92
    %v94 = vsel %vm57, %v53, 0.0
    %95 = vadd.xlane.f32.xlu0 %v94
    %v96 = vpop.xlane.xlu0 %95
    %v97 = vsel %vm57, %v54, 0.0
    %98 = vadd.xlane.f32.xlu0 %v97
    %v99 = vpop.xlane.xlu0 %98
    %v100 = vsel %vm57, %v55, 0.0
    %101 = vadd.xlane.f32.xlu0 %v100
    %v102 = vpop.xlane.xlu0 %101
    %v103 = vsel %vm57, %v56, 0.0
    %104 = vadd.xlane.f32.xlu0 %v103
    %v105 = vpop.xlane.xlu0 %104
    %v106 = vmul.f32 %v41, %v41
    %v107 = vmul.f32 %v42, %v42
    %v108 = vmul.f32 %v43, %v43
    %v109 = vmul.f32 %v44, %v44
    %v110 = vmul.f32 %v45, %v45
    %v111 = vmul.f32 %v46, %v46
    %v112 = vmul.f32 %v47, %v47
    %v113 = vmul.f32 %v48, %v48
    %v114 = vmul.f32 %v49, %v49
    %v115 = vmul.f32 %v50, %v50
    %v116 = vmul.f32 %v51, %v51
    %v117 = vmul.f32 %v52, %v52
    %v118 = vmul.f32 %v53, %v53
    %v119 = vmul.f32 %v54, %v54
    %v120 = vmul.f32 %v55, %v55
    %v121 = vmul.f32 %v56, %v56
    %v122 = vsel %vm57, %v106, 0.0
    %123 = vadd.xlane.f32.xlu0 %v122
    %v124 = vpop.xlane.xlu0 %123
    %v125 = vsel %vm57, %v107, 0.0
    %126 = vadd.xlane.f32.xlu0 %v125
    %v127 = vpop.xlane.xlu0 %126
    %v128 = vsel %vm57, %v108, 0.0
    %129 = vadd.xlane.f32.xlu0 %v128
    %v130 = vpop.xlane.xlu0 %129
    %v131 = vsel %vm57, %v109, 0.0
    %132 = vadd.xlane.f32.xlu0 %v131
    %v133 = vpop.xlane.xlu0 %132
    %v134 = vsel %vm57, %v110, 0.0
    %135 = vadd.xlane.f32.xlu0 %v134
    %v136 = vpop.xlane.xlu0 %135
    %v137 = vsel %vm57, %v111, 0.0
    %138 = vadd.xlane.f32.xlu0 %v137
    %v139 = vpop.xlane.xlu0 %138
    %v140 = vsel %vm57, %v112, 0.0
    %141 = vadd.xlane.f32.xlu0 %v140
    %v142 = vpop.xlane.xlu0 %141
    %v143 = vsel %vm57, %v113, 0.0
    %144 = vadd.xlane.f32.xlu0 %v143
    %v145 = vpop.xlane.xlu0 %144
    %v146 = vsel %vm57, %v114, 0.0
    %147 = vadd.xlane.f32.xlu0 %v146
    %v148 = vpop.xlane.xlu0 %147
    %v149 = vsel %vm57, %v115, 0.0
    %150 = vadd.xlane.f32.xlu0 %v149
    %v151 = vpop.xlane.xlu0 %150
    %v152 = vsel %vm57, %v116, 0.0
    %153 = vadd.xlane.f32.xlu0 %v152
    %v154 = vpop.xlane.xlu0 %153
    %v155 = vsel %vm57, %v117, 0.0
    %156 = vadd.xlane.f32.xlu0 %v155
    %v157 = vpop.xlane.xlu0 %156
    %v158 = vsel %vm57, %v118, 0.0
    %159 = vadd.xlane.f32.xlu0 %v158
    %v160 = vpop.xlane.xlu0 %159
    %v161 = vsel %vm57, %v119, 0.0
    %162 = vadd.xlane.f32.xlu0 %v161
    %v163 = vpop.xlane.xlu0 %162
    %v164 = vsel %vm57, %v120, 0.0
    %165 = vadd.xlane.f32.xlu0 %v164
    %v166 = vpop.xlane.xlu0 %165
    %v167 = vsel %vm57, %v121, 0.0
    %168 = vadd.xlane.f32.xlu0 %v167
    %v169 = vpop.xlane.xlu0 %168
    %v170 = vmul.f32 %v60, 0.041666668
    %v171 = vmul.f32 %v63, 0.041666668
    %v172 = vmul.f32 %v66, 0.041666668
    %v173 = vmul.f32 %v69, 0.041666668
    %v174 = vmul.f32 %v72, 0.041666668
    %v175 = vmul.f32 %v75, 0.041666668
    %v176 = vmul.f32 %v78, 0.041666668
    %v177 = vmul.f32 %v81, 0.041666668
    %v178 = vmul.f32 %v84, 0.041666668
    %v179 = vmul.f32 %v87, 0.041666668
    %v180 = vmul.f32 %v90, 0.041666668
    %v181 = vmul.f32 %v93, 0.041666668
    %v182 = vmul.f32 %v96, 0.041666668
    %v183 = vmul.f32 %v99, 0.041666668
    %v184 = vmul.f32 %v102, 0.041666668
    %v185 = vmul.f32 %v105, 0.041666668
    %v186 = vmul.f32 %v124, 0.041666668
    %v187 = vmul.f32 %v127, 0.041666668
    %v188 = vmul.f32 %v130, 0.041666668
    %v189 = vmul.f32 %v133, 0.041666668
    %v190 = vmul.f32 %v136, 0.041666668
    %v191 = vmul.f32 %v139, 0.041666668
    %v192 = vmul.f32 %v142, 0.041666668
    %v193 = vmul.f32 %v145, 0.041666668
    %v194 = vmul.f32 %v148, 0.041666668
    %v195 = vmul.f32 %v151, 0.041666668
    %v196 = vmul.f32 %v154, 0.041666668
    %v197 = vmul.f32 %v157, 0.041666668
    %v198 = vmul.f32 %v160, 0.041666668
    %v199 = vmul.f32 %v163, 0.041666668
    %v200 = vmul.f32 %v166, 0.041666668
    %v201 = vmul.f32 %v169, 0.041666668
    %v202 = vmul.f32 %v170, %v170
    %v203 = vmul.f32 %v171, %v171
    %v204 = vmul.f32 %v172, %v172
    %v205 = vmul.f32 %v173, %v173
    %v206 = vmul.f32 %v174, %v174
    %v207 = vmul.f32 %v175, %v175
    %v208 = vmul.f32 %v176, %v176
    %v209 = vmul.f32 %v177, %v177
    %v210 = vmul.f32 %v178, %v178
    %v211 = vmul.f32 %v179, %v179
    %v212 = vmul.f32 %v180, %v180
    %v213 = vmul.f32 %v181, %v181
    %v214 = vmul.f32 %v182, %v182
    %v215 = vmul.f32 %v183, %v183
    %v216 = vmul.f32 %v184, %v184
    %v217 = vmul.f32 %v185, %v185
    %v218 = vsub.f32 %v186, %v202
    %v219 = vsub.f32 %v187, %v203
    %v220 = vsub.f32 %v188, %v204
    %v221 = vsub.f32 %v189, %v205
    %v222 = vsub.f32 %v190, %v206
    %v223 = vsub.f32 %v191, %v207
    %v224 = vsub.f32 %v192, %v208
    %v225 = vsub.f32 %v193, %v209
    %v226 = vsub.f32 %v194, %v210
    %v227 = vsub.f32 %v195, %v211
    %v228 = vsub.f32 %v196, %v212
    %v229 = vsub.f32 %v197, %v213
    %v230 = vsub.f32 %v198, %v214
    %v231 = vsub.f32 %v199, %v215
    %v232 = vsub.f32 %v200, %v216
    %v233 = vsub.f32 %v201, %v217
    %v234 = vmax.f32 %v218, 0.0
    %v235 = vmax.f32 %v219, 0.0
    %v236 = vmax.f32 %v220, 0.0
    %v237 = vmax.f32 %v221, 0.0
    %v238 = vmax.f32 %v222, 0.0
    %v239 = vmax.f32 %v223, 0.0
    %v240 = vmax.f32 %v224, 0.0
    %v241 = vmax.f32 %v225, 0.0
    %v242 = vmax.f32 %v226, 0.0
    %v243 = vmax.f32 %v227, 0.0
    %v244 = vmax.f32 %v228, 0.0
    %v245 = vmax.f32 %v229, 0.0
    %v246 = vmax.f32 %v230, 0.0
    %v247 = vmax.f32 %v231, 0.0
    %v248 = vmax.f32 %v232, 0.0
    %v249 = vmax.f32 %v233, 0.0
    %v250 = vsub.f32 %v41, %v170
    %v251 = vsub.f32 %v42, %v171
    %v252 = vsub.f32 %v43, %v172
    %v253 = vsub.f32 %v44, %v173
    %v254 = vsub.f32 %v45, %v174
    %v255 = vsub.f32 %v46, %v175
    %v256 = vsub.f32 %v47, %v176
    %v257 = vsub.f32 %v48, %v177
    %v258 = vsub.f32 %v49, %v178
    %v259 = vsub.f32 %v50, %v179
    %v260 = vsub.f32 %v51, %v180
    %v261 = vsub.f32 %v52, %v181
    %v262 = vsub.f32 %v53, %v182
    %v263 = vsub.f32 %v54, %v183
    %v264 = vsub.f32 %v55, %v184
    %v265 = vsub.f32 %v56, %v185
    %v266 = vadd.f32 %v234, 1e-05
    %v267 = vadd.f32 %v235, 1e-05
    %v268 = vadd.f32 %v236, 1e-05
    %v269 = vadd.f32 %v237, 1e-05
    %v270 = vadd.f32 %v238, 1e-05
    %v271 = vadd.f32 %v239, 1e-05
    %v272 = vadd.f32 %v240, 1e-05
    %v273 = vadd.f32 %v241, 1e-05
    %v274 = vadd.f32 %v242, 1e-05
    %v275 = vadd.f32 %v243, 1e-05
    %v276 = vadd.f32 %v244, 1e-05
    %v277 = vadd.f32 %v245, 1e-05
    %v278 = vadd.f32 %v246, 1e-05
    %v279 = vadd.f32 %v247, 1e-05
    %v280 = vadd.f32 %v248, 1e-05
    %v281 = vadd.f32 %v249, 1e-05
    %v282 = vrsqrt.pop %v266
    %v283 = vrsqrt.pop %v267
    %v284 = vrsqrt.pop %v268
    %v285 = vrsqrt.pop %v269
    %v286 = vrsqrt.pop %v270
    %v287 = vrsqrt.pop %v271
    %v288 = vrsqrt.pop %v272
    %v289 = vrsqrt.pop %v273
    %v290 = vrsqrt.pop %v274
    %v291 = vrsqrt.pop %v275
    %v292 = vrsqrt.pop %v276
    %v293 = vrsqrt.pop %v277
    %v294 = vrsqrt.pop %v278
    %v295 = vrsqrt.pop %v279
    %v296 = vrsqrt.pop %v280
    %v297 = vrsqrt.pop %v281
    %v298 = vmul.f32 %v250, %v282
    %v299 = vmul.f32 %v251, %v283
    %v300 = vmul.f32 %v252, %v284
    %v301 = vmul.f32 %v253, %v285
    %v302 = vmul.f32 %v254, %v286
    %v303 = vmul.f32 %v255, %v287
    %v304 = vmul.f32 %v256, %v288
    %v305 = vmul.f32 %v257, %v289
    %v306 = vmul.f32 %v258, %v290
    %v307 = vmul.f32 %v259, %v291
    %v308 = vmul.f32 %v260, %v292
    %v309 = vmul.f32 %v261, %v293
    %v310 = vmul.f32 %v262, %v294
    %v311 = vmul.f32 %v263, %v295
    %v312 = vmul.f32 %v264, %v296
    %v313 = vmul.f32 %v265, %v297
    %v314 = vld [vmem:[%s1] sm:$0xff]
    %v315 = vld [vmem:[%s1 + $0x8] sm:$0xff]
    %v316 = vld [vmem:[%s2] sm:$0xff]
    %v317 = vld [vmem:[%s2 + $0x8] sm:$0xff]
    %319 = vset.pattern.permute.xlu0 0
    %320 = vperm.xlu0 %319, %v316
    %v321 = vpop.permute.xlu0 %320
    %324 = vset.pattern.permute.xlu0 0
    %325 = vperm.xlu0 %324, %v317
    %v326 = vpop.permute.xlu0 %325
    %v329 = vsel %vm57, %v314, 0
    %v332 = vsel %vm57, %v315, 0
    %v335 = vsel %vm57, %v298, 0
    %v338 = vsel %vm57, %v299, 0
    %v341 = vsel %vm57, %v300, 0
    %v344 = vsel %vm57, %v301, 0
    %v347 = vsel %vm57, %v302, 0
    %v350 = vsel %vm57, %v303, 0
    %v353 = vsel %vm57, %v304, 0
    %v356 = vsel %vm57, %v305, 0
    %v359 = vsel %vm57, %v306, 0
    %v362 = vsel %vm57, %v307, 0
    %v365 = vsel %vm57, %v308, 0
    %v368 = vsel %vm57, %v309, 0
    %v371 = vsel %vm57, %v310, 0
    %v374 = vsel %vm57, %v311, 0
    %v377 = vsel %vm57, %v312, 0
    %v380 = vsel %vm57, %v313, 0
    %382 = vmatprep.subr.mxu0 0.0
    %383 = vmatpush1.xpose.msra.mxu0 %v335
    %384 = vmatprep.subr.mxu0 0.0
    %385 = vmatpush1.xpose.msra.mxu0 %v338
    %386 = vmatprep.subr.mxu0 0.0
    %387 = vmatpush1.xpose.msra.mxu0 %v341
    %388 = vmatprep.subr.mxu0 0.0
    %389 = vmatpush1.xpose.msra.mxu0 %v344
    %390 = vmatprep.subr.mxu0 0.0
    %391 = vmatpush1.xpose.msra.mxu0 %v347
    %392 = vmatprep.subr.mxu0 0.0
    %393 = vmatpush1.xpose.msra.mxu0 %v350
    %394 = vmatprep.subr.mxu0 0.0
    %395 = vmatpush1.xpose.msra.mxu0 %v353
    %396 = vmatprep.subr.mxu0 0.0
    %397 = vmatpush1.xpose.msra.mxu0 %v356
    %398 = vmatprep.subr.mxu0 0.0
    %399 = vmatpush1.xpose.msra.mxu0 %v359
    %400 = vmatprep.subr.mxu0 0.0
    %401 = vmatpush1.xpose.msra.mxu0 %v362
    %402 = vmatprep.subr.mxu0 0.0
    %403 = vmatpush1.xpose.msra.mxu0 %v365
    %404 = vmatprep.subr.mxu0 0.0
    %405 = vmatpush1.xpose.msra.mxu0 %v368
    %406 = vmatprep.subr.mxu0 0.0
    %407 = vmatpush1.xpose.msra.mxu0 %v371
    %408 = vmatprep.subr.mxu0 0.0
    %409 = vmatpush1.xpose.msra.mxu0 %v374
    %410 = vmatprep.subr.mxu0 0.0
    %411 = vmatpush1.xpose.msra.mxu0 %v377
    %412 = vmatprep.subr.mxu0 0.0
    %413 = vmatpush1.xpose.msra.mxu0 %v380
    %414 = vmatprep.subr.mxu0 0.0
    %415 = vmatpush1.xpose.msra.mxu0 0.0
    %416 = vmatprep.subr.mxu0 0.0
    %417 = vmatpush1.xpose.msra.mxu0 0.0
    %418 = vmatprep.subr.mxu0 0.0
    %419 = vmatpush1.xpose.msra.mxu0 0.0
    %420 = vmatprep.subr.mxu0 0.0
    %421 = vmatpush1.xpose.msra.mxu0 0.0
    %422 = vmatprep.subr.mxu0 0.0
    %423 = vmatpush1.xpose.msra.mxu0 0.0
    %424 = vmatprep.subr.mxu0 0.0
    %425 = vmatpush1.xpose.msra.mxu0 0.0
    %426 = vmatprep.subr.mxu0 0.0
    %427 = vmatpush1.xpose.msra.mxu0 0.0
    %428 = vmatprep.subr.mxu0 0.0
    %429 = vmatpush1.xpose.msra.mxu0 0.0
    %430 = vmatprep.subr.mxu0 0.0
    %431 = vmatpush1.xpose.msra.mxu0 0.0
    %432 = vmatprep.subr.mxu0 0.0
    %433 = vmatpush1.xpose.msra.mxu0 0.0
    %434 = vmatprep.subr.mxu0 0.0
    %435 = vmatpush1.xpose.msra.mxu0 0.0
    %436 = vmatprep.subr.mxu0 0.0
    %437 = vmatpush1.xpose.msra.mxu0 0.0
    %438 = vmatprep.subr.mxu0 0.0
    %439 = vmatpush1.xpose.msra.mxu0 0.0
    %440 = vmatprep.subr.mxu0 0.0
    %441 = vmatpush1.xpose.msra.mxu0 0.0
    %442 = vmatprep.subr.mxu0 0.0
    %443 = vmatpush1.xpose.msra.mxu0 0.0
    %444 = vmatprep.subr.mxu0 0.0
    %445 = vmatpush1.xpose.msra.mxu0 0.0
    %446 = vmatprep.mubr.f32.mxu0 0.0
    %447 = vmatmul.mubr.f32.gmra.mrb[0].mxu0 %v329
    %v448 = vpop.f32.mrb[0].mxu0
    %v449 = vadd.f32 %v321, %v448
    %v450 = vpop.f32.mrb[0].mxu0
    %451 = vmatprep.mubr.f32.mxu0 0.0
    %452 = vmatmul.mubr.f32.gmra.mrb[0].mxu0 %v332
    %v453 = vpop.f32.mrb[0].mxu0
    %v454 = vadd.f32 %v326, %v453
    %v455 = vpop.f32.mrb[0].mxu0
    %456 = vdwg.mxu0
    %v457 = vmax.f32 %v449, 0.0
    %v458 = vmax.f32 %v454, 0.0
    %v459 = vld [vmem:[%s3] sm:$0xff]
    %v460 = vld [vmem:[%s3 + $0x8] sm:$0xff]
    %v461 = vld [vmem:[%s4] sm:$0xff]
    %v462 = vld [vmem:[%s4 + $0x8] sm:$0xff]
    %464 = vset.pattern.permute.xlu0 0
    %465 = vperm.xlu0 %464, %v461
    %v466 = vpop.permute.xlu0 %465
    %469 = vset.pattern.permute.xlu0 0
    %470 = vperm.xlu0 %469, %v462
    %v471 = vpop.permute.xlu0 %470
    %vm473 = vcmask 130048
    %v475 = vsel %vm473, %v459, 0
    %v478 = vsel %vm473, %v460, 0
    %480 = vmatprep.subr.mxu0 0.0
    %481 = vmatpush1.msra.mxu0 %v457
    %482 = vmatprep.subr.mxu0 0.0
    %483 = vmatpush1.msra.mxu0 %v458
    %484 = vmatprep.subr.mxu0 0.0
    %485 = vmatpush1.msra.mxu0 0.0
    %486 = vmatprep.subr.mxu0 0.0
    %487 = vmatpush1.msra.mxu0 0.0
    %488 = vmatprep.subr.mxu0 0.0
    %489 = vmatpush1.msra.mxu0 0.0
    %490 = vmatprep.subr.mxu0 0.0
    %491 = vmatpush1.msra.mxu0 0.0
    %492 = vmatprep.subr.mxu0 0.0
    %493 = vmatpush1.msra.mxu0 0.0
    %494 = vmatprep.subr.mxu0 0.0
    %495 = vmatpush1.msra.mxu0 0.0
    %496 = vmatprep.subr.mxu0 0.0
    %497 = vmatpush1.msra.mxu0 0.0
    %498 = vmatprep.subr.mxu0 0.0
    %499 = vmatpush1.msra.mxu0 0.0
    %500 = vmatprep.subr.mxu0 0.0
    %501 = vmatpush1.msra.mxu0 0.0
    %502 = vmatprep.subr.mxu0 0.0
    %503 = vmatpush1.msra.mxu0 0.0
    %504 = vmatprep.subr.mxu0 0.0
    %505 = vmatpush1.msra.mxu0 0.0
    %506 = vmatprep.subr.mxu0 0.0
    %507 = vmatpush1.msra.mxu0 0.0
    %508 = vmatprep.subr.mxu0 0.0
    %509 = vmatpush1.msra.mxu0 0.0
    %510 = vmatprep.subr.mxu0 0.0
    %511 = vmatpush1.msra.mxu0 0.0
    %512 = vmatprep.subr.mxu0 0.0
    %513 = vmatpush1.msra.mxu0 0.0
    %514 = vmatprep.subr.mxu0 0.0
    %515 = vmatpush1.msra.mxu0 0.0
    %516 = vmatprep.subr.mxu0 0.0
    %517 = vmatpush1.msra.mxu0 0.0
    %518 = vmatprep.subr.mxu0 0.0
    %519 = vmatpush1.msra.mxu0 0.0
    %520 = vmatprep.subr.mxu0 0.0
    %521 = vmatpush1.msra.mxu0 0.0
    %522 = vmatprep.subr.mxu0 0.0
    %523 = vmatpush1.msra.mxu0 0.0
    %524 = vmatprep.subr.mxu0 0.0
    %525 = vmatpush1.msra.mxu0 0.0
    %526 = vmatprep.subr.mxu0 0.0
    %527 = vmatpush1.msra.mxu0 0.0
    %528 = vmatprep.subr.mxu0 0.0
    %529 = vmatpush1.msra.mxu0 0.0
    %530 = vmatprep.subr.mxu0 0.0
    %531 = vmatpush1.msra.mxu0 0.0
    %532 = vmatprep.subr.mxu0 0.0
    %533 = vmatpush1.msra.mxu0 0.0
    %534 = vmatprep.subr.mxu0 0.0
    %535 = vmatpush1.msra.mxu0 0.0
    %536 = vmatprep.subr.mxu0 0.0
    %537 = vmatpush1.msra.mxu0 0.0
    %538 = vmatprep.subr.mxu0 0.0
    %539 = vmatpush1.msra.mxu0 0.0
    %540 = vmatprep.subr.mxu0 0.0
    %541 = vmatpush1.msra.mxu0 0.0
    %542 = vmatprep.subr.mxu0 0.0
    %543 = vmatpush1.msra.mxu0 0.0
    %544 = vmatprep.mubr.f32.mxu0 0.0
    %545 = vmatmul.mubr.f32.gmra.mrb[0].mxu0 %v475
    %v546 = vpop.f32.mrb[0].mxu0
    %v547 = vadd.f32 %v466, %v546
    %v548 = vpop.f32.mrb[0].mxu0
    %549 = vmatprep.mubr.f32.mxu0 0.0
    %550 = vmatmul.mubr.f32.gmra.mrb[0].mxu0 %v478
    %v551 = vpop.f32.mrb[0].mxu0
    %v552 = vadd.f32 %v471, %v551
    %v553 = vpop.f32.mrb[0].mxu0
    %554 = vdwg.mxu0
    %v555 = vmax.f32 %v547, 0.0
    %v556 = vmax.f32 %v552, 0.0
    %v557 = vld [vmem:[%s5] sm:$0xf]
    %v558 = vld [vmem:[%s6] sm:$0xf]
    %560 = vset.pattern.permute.xlu0 0
    %561 = vperm.xlu0 %560, %v558
    %v562 = vpop.permute.xlu0 %561
    %v565 = vsel %vm473, %v557, 0
    %567 = vmatprep.subr.mxu0 0.0
    %568 = vmatpush1.msra.mxu0 %v555
    %569 = vmatprep.subr.mxu0 0.0
    %570 = vmatpush1.msra.mxu0 %v556
    %571 = vmatprep.subr.mxu0 0.0
    %572 = vmatpush1.msra.mxu0 0.0
    %573 = vmatprep.subr.mxu0 0.0
    %574 = vmatpush1.msra.mxu0 0.0
    %575 = vmatprep.subr.mxu0 0.0
    %576 = vmatpush1.msra.mxu0 0.0
    %577 = vmatprep.subr.mxu0 0.0
    %578 = vmatpush1.msra.mxu0 0.0
    %579 = vmatprep.subr.mxu0 0.0
    %580 = vmatpush1.msra.mxu0 0.0
    %581 = vmatprep.subr.mxu0 0.0
    %582 = vmatpush1.msra.mxu0 0.0
    %583 = vmatprep.subr.mxu0 0.0
    %584 = vmatpush1.msra.mxu0 0.0
    %585 = vmatprep.subr.mxu0 0.0
    %586 = vmatpush1.msra.mxu0 0.0
    %587 = vmatprep.subr.mxu0 0.0
    %588 = vmatpush1.msra.mxu0 0.0
    %589 = vmatprep.subr.mxu0 0.0
    %590 = vmatpush1.msra.mxu0 0.0
    %591 = vmatprep.subr.mxu0 0.0
    %592 = vmatpush1.msra.mxu0 0.0
    %593 = vmatprep.subr.mxu0 0.0
    %594 = vmatpush1.msra.mxu0 0.0
    %595 = vmatprep.subr.mxu0 0.0
    %596 = vmatpush1.msra.mxu0 0.0
    %597 = vmatprep.subr.mxu0 0.0
    %598 = vmatpush1.msra.mxu0 0.0
    %599 = vmatprep.subr.mxu0 0.0
    %600 = vmatpush1.msra.mxu0 0.0
    %601 = vmatprep.subr.mxu0 0.0
    %602 = vmatpush1.msra.mxu0 0.0
    %603 = vmatprep.subr.mxu0 0.0
    %604 = vmatpush1.msra.mxu0 0.0
    %605 = vmatprep.subr.mxu0 0.0
    %606 = vmatpush1.msra.mxu0 0.0
    %607 = vmatprep.subr.mxu0 0.0
    %608 = vmatpush1.msra.mxu0 0.0
    %609 = vmatprep.subr.mxu0 0.0
    %610 = vmatpush1.msra.mxu0 0.0
    %611 = vmatprep.subr.mxu0 0.0
    %612 = vmatpush1.msra.mxu0 0.0
    %613 = vmatprep.subr.mxu0 0.0
    %614 = vmatpush1.msra.mxu0 0.0
    %615 = vmatprep.subr.mxu0 0.0
    %616 = vmatpush1.msra.mxu0 0.0
    %617 = vmatprep.subr.mxu0 0.0
    %618 = vmatpush1.msra.mxu0 0.0
    %619 = vmatprep.subr.mxu0 0.0
    %620 = vmatpush1.msra.mxu0 0.0
    %621 = vmatprep.subr.mxu0 0.0
    %622 = vmatpush1.msra.mxu0 0.0
    %623 = vmatprep.subr.mxu0 0.0
    %624 = vmatpush1.msra.mxu0 0.0
    %625 = vmatprep.subr.mxu0 0.0
    %626 = vmatpush1.msra.mxu0 0.0
    %627 = vmatprep.subr.mxu0 0.0
    %628 = vmatpush1.msra.mxu0 0.0
    %629 = vmatprep.subr.mxu0 0.0
    %630 = vmatpush1.msra.mxu0 0.0
    %631 = vmatprep.mubr.f32.mxu0 0.0
    %632 = vmatmul.mubr.f32.gmra.mrb[0].mxu0 %v565
    %v633 = vpop.f32.mrb[0].mxu0
    %v634 = vadd.f32 %v562, %v633
    %v635 = vpop.f32.mrb[0].mxu0
    %636 = vdwg.mxu0
    %637 = vst [vmem:[#allocation5] sm:$0xf] %v634
    // Predicated region
    $region34: #{tpu_custom_call.1} parent=1 // pred_check
      _
    $region35: #{tpu_custom_call.1} parent=1 // pred_check_branch
      %639 = sbr.rel (0) target = $region37
    $region36: #{tpu_custom_call.1} parent=1 // pred_region
      %s641 = ssub.s32 64, 64
      %642 = vsyncadd [#allocation4], %s641
      %s644 = sshll.u32 [#allocation5], 4
      %s645 = int_to_ptr.vmem [resolvable:$true] %s644
      %647 = dma.vmem_to_hbm [thread:$0]  %s645, 64, %s7, [#allocation4]
    $region37: #{tpu_custom_call.1} parent=1 // pred_fallthru
      _
    // Predicated region
    $region38: #{tpu_custom_call.1} parent=1 // pred_check
      _
    $region39: #{tpu_custom_call.1} parent=1 // pred_check_branch
      %649 = sbr.rel (0) target = $region41
    $region40: #{tpu_custom_call.1} parent=1 // pred_region
      %650 = dma.done [#allocation4], 64
    $region41: #{tpu_custom_call.1} parent=1 // pred_fallthru
      _
    %651 = vsyncpa [#allocation3], 1
    %652 = vsyncpa [#allocation4], 1

</llo_original>
